<compile_context>
chip_gen: v7x
topology: tpu7x:2x2x1
jax: 0.10.0
libtpu: 0.0.40
codegen_flags: <defaults>
</compile_context>

<pallas_src>
import jax
import jax.numpy as jnp
from jax.experimental import pallas as pl
from jax.experimental.pallas import tpu as pltpu

LAYER_DIMS = [(26, 64), (64, 64), (64, 64), (64, 32), (32, 1)]  # (in, out)
F_IN = 26
F_PAD = 32          # feature dim padded to a multiple of the bf16 sublane pack (16)
H = 64              # hidden width; layers 1-4 padded to 64 outputs where needed
TB_CAP = 8192       # keeps the per-step VMEM working set < ~8 MiB (v7x-safe)
LANES = 128


def _round_up(x, m):
    return ((x + m - 1) // m) * m


def _pick_tb(batch, tb_req, *, tb_cap=TB_CAP):
    """128-aligned batch tile.  Prefer large tiles (amortize per-step overhead)
    but keep >= 2 tiles whenever the batch allows so v7x's two TensorCores both
    get work via the "parallel" grid axis."""
    b_lanes = _round_up(max(int(batch), 1), LANES)
    tb = max(LANES, (int(tb_req) // LANES) * LANES)
    tb = min(tb, tb_cap)
    if b_lanes >= 2 * LANES:
        tb = min(tb, (b_lanes // 2 // LANES) * LANES)
    return min(tb, b_lanes)


def pack_params(params):
    """One-time host-side packing of torch-style params into two slabs.

    wslab: (4, 64, 64) bf16 -- W1 (in-padded 26->32, rest zero), W2, W3,
           W4 (out-padded 32->64 with zero rows).
    bslab: (64, 8) f32 -- cols 0..3 = b1..b4 (b4 zero-padded), col 4 = w5^T
           (zero-padded to 64 rows), col 5 row 0 = b5.
    Zero padding is exact: padded rows of h4 are relu(0)=0 and multiply zero
    entries of w5, so the 32->1 result is unchanged.
    """
    (w1, b1), (w2, b2), (w3, b3), (w4, b4), (w5, b5) = params
    wslab = jnp.zeros((4, H, H), jnp.float32)
    wslab = wslab.at[0, :, :F_IN].set(w1)
    wslab = wslab.at[1].set(w2)
    wslab = wslab.at[2].set(w3)
    wslab = wslab.at[3, :32, :].set(w4)
    wslab = wslab.astype(jnp.bfloat16)

    bslab = jnp.zeros((H, 8), jnp.float32)
    bslab = bslab.at[:, 0].set(b1)
    bslab = bslab.at[:, 1].set(b2)
    bslab = bslab.at[:, 2].set(b3)
    bslab = bslab.at[:32, 3].set(b4)
    bslab = bslab.at[:32, 4].set(w5[0])   # w5 is (1, 32) -> stored as a column
    bslab = bslab.at[0, 5].set(b5[0])
    return wslab, bslab


def _mlp_kernel(x_ref, w_ref, b_ref, o_ref):
    """One batch tile: x_ref is (F_PAD, TB) bf16 with the batch on lanes."""

    def dense_relu(w, b, h):
        acc = jnp.dot(w, h, preferred_element_type=jnp.float32)   # MXU, f32 acc
        return jnp.maximum(acc + b, 0.0)

    h = x_ref[...]                                                   # (32, TB) bf16
    h = dense_relu(w_ref[0, :, 0:F_PAD], b_ref[:, 0:1], h).astype(jnp.bfloat16)
    h = dense_relu(w_ref[1], b_ref[:, 1:2], h).astype(jnp.bfloat16)  # (64, TB)
    h = dense_relu(w_ref[2], b_ref[:, 2:3], h).astype(jnp.bfloat16)  # (64, TB)
    h = dense_relu(w_ref[3], b_ref[:, 3:4], h)                       # (64, TB) f32

    # Final 32->1 (zero-padded to 64) layer: VPU multiply + sublane (XLU)
    # reduction instead of a degenerate single-output-lane MXU matmul.
    z = jnp.sum(b_ref[:, 4:5] * h, axis=0, keepdims=True) + b_ref[0:1, 5:6]
    z = jnp.clip(z, -30.0, 30.0)   # keep exp finite for extreme logits
    # exp + approx reciprocal both run on the otherwise-idle EUP.
    o_ref[...] = pl.reciprocal(1.0 + jnp.exp(-z), approx=True)


def _forward_fm(x_fm, wslab, bslab, tb):
    """x_fm: (F_PAD, b_pad) bf16, feature-major, b_pad a multiple of tb."""
    f, b_pad = x_fm.shape
    assert f == F_PAD and b_pad % tb == 0 and x_fm.dtype == jnp.bfloat16
    n_tiles = b_pad // tb

    flops_per_row = 2 * sum(fi * fo for fi, fo in LAYER_DIMS)
    cost = pl.CostEstimate(
        flops=int(flops_per_row) * int(b_pad),
        transcendentals=2 * int(b_pad),
        bytes_accessed=int(x_fm.size) * 2 + int(b_pad) * 4
        + int(wslab.size) * 2 + int(bslab.size) * 4,
    )

    return pl.pallas_call(
        _mlp_kernel,
        out_shape=jax.ShapeDtypeStruct((1, b_pad), jnp.float32),
        grid=(n_tiles,),
        in_specs=[
            pl.BlockSpec((F_PAD, tb), lambda i: (0, i)),      # batch-tiled, double-buffered
            pl.BlockSpec((4, H, H), lambda i: (0, 0, 0)),     # VMEM-resident weight slab
            pl.BlockSpec((H, 8), lambda i: (0, 0)),           # VMEM-resident bias/w5 slab
        ],
        out_specs=pl.BlockSpec((1, tb), lambda i: (0, i)),    # lane-dense output slab
        compiler_params=pltpu.CompilerParams(dimension_semantics=("parallel",)),
        cost_estimate=cost,
    )(x_fm, wslab, bslab)


def loan_approval_forward(x, params, *, tb=4096):
    """x: (B, 26) float. params: torch-style [(W, b)] with W (out, in), b (out,)."""
    B, F = x.shape
    assert F == F_IN
    wslab, bslab = pack_params(params)   # NOTE: precompute once per model in production
    tb_eff = _pick_tb(B, tb)
    b_pad = int(pl.cdiv(B, tb_eff)) * tb_eff
    # Single fused pad + bf16 cast + transpose (one XLA pass over x).  Producers
    # that can hand over feature-major bf16 should use loan_approval_forward_fm
    # and skip this pass entirely.
    x_fm = jnp.pad(x.astype(jnp.bfloat16), ((0, b_pad - B), (0, F_PAD - F))).T
    out = _forward_fm(x_fm, wslab, bslab, tb_eff)
    return out[0, :B].reshape(B, 1)


def loan_approval_forward_fm(x_fm, params, *, tb=4096):
    """Feature-major fast path: x_fm is (26 or 32, B), ideally already bf16."""
    F, B = x_fm.shape
    assert F in (F_IN, F_PAD)
    wslab, bslab = pack_params(params)
    tb_eff = _pick_tb(B, tb)
    b_pad = int(pl.cdiv(B, tb_eff)) * tb_eff
    x_fm = x_fm.astype(jnp.bfloat16)
    if F != F_PAD or b_pad != B:
        x_fm = jnp.pad(x_fm, ((0, F_PAD - F), (0, b_pad - B)))
    out = _forward_fm(x_fm, wslab, bslab, tb_eff)
    return out[0, :B].reshape(B, 1)


def init_params(key):
    """Deterministic init mirroring nn.Linear: W (out, in), b (out,), U(+-1/sqrt(fan_in))."""
    params = []
    for fan_in, fan_out in LAYER_DIMS:
        key, kw, kb = jax.random.split(key, 3)
        bound = float(fan_in) ** -0.5
        w = jax.random.uniform(kw, (fan_out, fan_in), jnp.float32, -bound, bound)
        b = jax.random.uniform(kb, (fan_out,), jnp.float32, -bound, bound)
        params.append((w, b))
    return params


def reference_forward(x, params):
    h = x
    for i, (w, b) in enumerate(params):
        h = h @ w.T + b
        if i < len(params) - 1:
            h = jnp.maximum(h, 0.0)
    return jax.nn.sigmoid(h)


if __name__ == "__main__":
    key = jax.random.PRNGKey(0)
    key, kx, kx2 = jax.random.split(key, 3)
    params = init_params(key)

    # Small demo batch (single tile).
    B = 8
    x = jax.random.normal(kx, (B, 26), jnp.float32)
    out = jax.block_until_ready(loan_approval_forward(x, params))
    ref = reference_forward(x, params)
    assert out.shape == (B, 1)
    assert bool(jnp.all(jnp.isfinite(out)))
    # bf16 matmul inputs + approx reciprocal -> loose tolerance vs the f32 reference.
    assert jnp.allclose(out, ref, atol=2e-2, rtol=0.0), (
        f"mismatch vs JAX reference: max abs err {float(jnp.max(jnp.abs(out - ref)))}")

    # Multi-tile + ragged-batch (padding) path; tb clamp gives 3 tiles of 128 here.
    B2 = 300
    x2 = jax.random.normal(kx2, (B2, 26), jnp.float32)
    out2 = jax.block_until_ready(loan_approval_forward(x2, params, tb=4096))
    ref2 = reference_forward(x2, params)
    assert out2.shape == (B2, 1)
    assert jnp.allclose(out2, ref2, atol=2e-2, rtol=0.0), (
        f"tiled mismatch vs JAX reference: max abs err {float(jnp.max(jnp.abs(out2 - ref2)))}")

    # Feature-major fast path (producer supplies (26, B) bf16 -> no wrapper HBM pass).
    out3 = jax.block_until_ready(
        loan_approval_forward_fm(x.astype(jnp.bfloat16).T, params))
    assert jnp.allclose(out3, ref, atol=2e-2, rtol=0.0), (
        f"fm-path mismatch vs JAX reference: max abs err {float(jnp.max(jnp.abs(out3 - ref)))}")

    print("KERNEL_OK")
</pallas_src>

<mosaic_0001>
module attributes {stable_mosaic.version = 11 : i64} {
  func.func @_mlp_kernel(%arg0: i32, %arg1: memref<32x128xbf16, #tpu.memory_space<vmem>>, %arg2: memref<4x64x64xbf16, #tpu.memory_space<vmem>>, %arg3: memref<64x8xf32, #tpu.memory_space<vmem>>, %arg4: memref<1x128xf32, #tpu.memory_space<vmem>>) attributes {dimension_semantics = [#tpu.dimension_semantics<parallel>], iteration_bounds = array<i64: 1>, scalar_prefetch = 0 : i64, scratch_operands = 0 : i64, tpu.core_type = #tpu.core_type<tc>, window_params = [{transform_indices = @transform_0, window_bounds = array<i64: 32, 128>}, {pipeline_mode = #tpu.pipeline_mode<synchronous>, transform_indices = @transform_1, window_bounds = array<i64: 4, 64, 64>}, {pipeline_mode = #tpu.pipeline_mode<synchronous>, transform_indices = @transform_2, window_bounds = array<i64: 64, 8>}, {transform_indices = @transform_3, window_bounds = array<i64: 1, 128>}]} {
    %c0 = arith.constant 0 : index
    %c0_0 = arith.constant 0 : index
    %0 = vector.load %arg1[%c0, %c0_0] : memref<32x128xbf16, #tpu.memory_space<vmem>>, vector<32x128xbf16>
    %c0_1 = arith.constant 0 : index
    %c0_2 = arith.constant 0 : index
    %c0_3 = arith.constant 0 : index
    %1 = vector.load %arg2[%c0_1, %c0_2, %c0_3] : memref<4x64x64xbf16, #tpu.memory_space<vmem>>, vector<1x64x32xbf16>
    %2 = vector.shape_cast %1 : vector<1x64x32xbf16> to vector<64x32xbf16>
    %c0_4 = arith.constant 0 : index
    %c0_5 = arith.constant 0 : index
    %3 = vector.load %arg3[%c0_4, %c0_5] : memref<64x8xf32, #tpu.memory_space<vmem>>, vector<64x1xf32>
    %cst = arith.constant dense<0.000000e+00> : vector<64x128xf32>
    %4 = tpu.matmul %2, %0, %cst {dimension_numbers = #tpu.dot_dimension_numbers<[1], [0], [0], [1], [0, 0, 1, 1], [], []>} : vector<64x32xbf16>, vector<32x128xbf16>, vector<64x128xf32> -> vector<64x128xf32>
    %5 = vector.broadcast %3 : vector<64x1xf32> to vector<64x128xf32>
    %6 = arith.addf %4, %5 : vector<64x128xf32>
    %cst_6 = arith.constant 0.000000e+00 : f32
    %7 = vector.broadcast %cst_6 : f32 to vector<64x128xf32>
    %8 = arith.maximumf %6, %7 : vector<64x128xf32>
    %9 = arith.truncf %8 : vector<64x128xf32> to vector<64x128xbf16>
    %c1 = arith.constant 1 : index
    %c0_7 = arith.constant 0 : index
    %c0_8 = arith.constant 0 : index
    %10 = vector.load %arg2[%c1, %c0_7, %c0_8] : memref<4x64x64xbf16, #tpu.memory_space<vmem>>, vector<1x64x64xbf16>
    %11 = vector.shape_cast %10 : vector<1x64x64xbf16> to vector<64x64xbf16>
    %c0_9 = arith.constant 0 : index
    %c1_10 = arith.constant 1 : index
    %12 = vector.load %arg3[%c0_9, %c1_10] : memref<64x8xf32, #tpu.memory_space<vmem>>, vector<64x1xf32>
    %cst_11 = arith.constant dense<0.000000e+00> : vector<64x128xf32>
    %13 = tpu.matmul %11, %9, %cst_11 {dimension_numbers = #tpu.dot_dimension_numbers<[1], [0], [0], [1], [0, 0, 1, 1], [], []>} : vector<64x64xbf16>, vector<64x128xbf16>, vector<64x128xf32> -> vector<64x128xf32>
    %14 = vector.broadcast %12 : vector<64x1xf32> to vector<64x128xf32>
    %15 = arith.addf %13, %14 : vector<64x128xf32>
    %cst_12 = arith.constant 0.000000e+00 : f32
    %16 = vector.broadcast %cst_12 : f32 to vector<64x128xf32>
    %17 = arith.maximumf %15, %16 : vector<64x128xf32>
    %18 = arith.truncf %17 : vector<64x128xf32> to vector<64x128xbf16>
    %c2 = arith.constant 2 : index
    %c0_13 = arith.constant 0 : index
    %c0_14 = arith.constant 0 : index
    %19 = vector.load %arg2[%c2, %c0_13, %c0_14] : memref<4x64x64xbf16, #tpu.memory_space<vmem>>, vector<1x64x64xbf16>
    %20 = vector.shape_cast %19 : vector<1x64x64xbf16> to vector<64x64xbf16>
    %c0_15 = arith.constant 0 : index
    %c2_16 = arith.constant 2 : index
    %21 = vector.load %arg3[%c0_15, %c2_16] : memref<64x8xf32, #tpu.memory_space<vmem>>, vector<64x1xf32>
    %cst_17 = arith.constant dense<0.000000e+00> : vector<64x128xf32>
    %22 = tpu.matmul %20, %18, %cst_17 {dimension_numbers = #tpu.dot_dimension_numbers<[1], [0], [0], [1], [0, 0, 1, 1], [], []>} : vector<64x64xbf16>, vector<64x128xbf16>, vector<64x128xf32> -> vector<64x128xf32>
    %23 = vector.broadcast %21 : vector<64x1xf32> to vector<64x128xf32>
    %24 = arith.addf %22, %23 : vector<64x128xf32>
    %cst_18 = arith.constant 0.000000e+00 : f32
    %25 = vector.broadcast %cst_18 : f32 to vector<64x128xf32>
    %26 = arith.maximumf %24, %25 : vector<64x128xf32>
    %27 = arith.truncf %26 : vector<64x128xf32> to vector<64x128xbf16>
    %c3 = arith.constant 3 : index
    %c0_19 = arith.constant 0 : index
    %c0_20 = arith.constant 0 : index
    %28 = vector.load %arg2[%c3, %c0_19, %c0_20] : memref<4x64x64xbf16, #tpu.memory_space<vmem>>, vector<1x64x64xbf16>
    %29 = vector.shape_cast %28 : vector<1x64x64xbf16> to vector<64x64xbf16>
    %c0_21 = arith.constant 0 : index
    %c3_22 = arith.constant 3 : index
    %30 = vector.load %arg3[%c0_21, %c3_22] : memref<64x8xf32, #tpu.memory_space<vmem>>, vector<64x1xf32>
    %cst_23 = arith.constant dense<0.000000e+00> : vector<64x128xf32>
    %31 = tpu.matmul %29, %27, %cst_23 {dimension_numbers = #tpu.dot_dimension_numbers<[1], [0], [0], [1], [0, 0, 1, 1], [], []>} : vector<64x64xbf16>, vector<64x128xbf16>, vector<64x128xf32> -> vector<64x128xf32>
    %32 = vector.broadcast %30 : vector<64x1xf32> to vector<64x128xf32>
    %33 = arith.addf %31, %32 : vector<64x128xf32>
    %cst_24 = arith.constant 0.000000e+00 : f32
    %34 = vector.broadcast %cst_24 : f32 to vector<64x128xf32>
    %35 = arith.maximumf %33, %34 : vector<64x128xf32>
    %c0_25 = arith.constant 0 : index
    %c4 = arith.constant 4 : index
    %36 = vector.load %arg3[%c0_25, %c4] : memref<64x8xf32, #tpu.memory_space<vmem>>, vector<64x1xf32>
    %37 = vector.broadcast %36 : vector<64x1xf32> to vector<64x128xf32>
    %38 = arith.mulf %37, %35 : vector<64x128xf32>
    %cst_26 = arith.constant dense<0.000000e+00> : vector<128xf32>
    %39 = vector.multi_reduction <add>, %38, %cst_26 [0] : vector<64x128xf32> to vector<128xf32>
    %40 = vector.shape_cast %39 : vector<128xf32> to vector<1x128xf32>
    %c0_27 = arith.constant 0 : index
    %c5 = arith.constant 5 : index
    %41 = vector.load %arg3[%c0_27, %c5] : memref<64x8xf32, #tpu.memory_space<vmem>>, vector<1x1xf32>
    %42 = vector.broadcast %41 : vector<1x1xf32> to vector<1x128xf32>
    %43 = arith.addf %40, %42 : vector<1x128xf32>
    %cst_28 = arith.constant -3.000000e+01 : f32
    %cst_29 = arith.constant 3.000000e+01 : f32
    %44 = vector.broadcast %cst_28 : f32 to vector<1x128xf32>
    %45 = arith.maximumf %44, %43 : vector<1x128xf32>
    %46 = vector.broadcast %cst_29 : f32 to vector<1x128xf32>
    %47 = arith.minimumf %46, %45 : vector<1x128xf32>
    %cst_30 = arith.constant 0.000000e+00 : f32
    %48 = vector.broadcast %cst_30 : f32 to vector<1x128xf32>
    %49 = arith.subf %48, %47 : vector<1x128xf32>
    %50 = math.exp %49 : vector<1x128xf32>
    %cst_31 = arith.constant 1.000000e+00 : f32
    %51 = vector.broadcast %cst_31 : f32 to vector<1x128xf32>
    %52 = arith.addf %51, %50 : vector<1x128xf32>
    %53 = tpu.reciprocal %52 {approx = true} : vector<1x128xf32> -> vector<1x128xf32>
    %c0_32 = arith.constant 0 : index
    %c0_33 = arith.constant 0 : index
    %54 = vector.load %arg4[%c0_32, %c0_33] : memref<1x128xf32, #tpu.memory_space<vmem>>, vector<1x128xf32>
    tpu.vector_store %arg4[%c0_32, %c0_33], %53 {strides = array<i32>} : memref<1x128xf32, #tpu.memory_space<vmem>>, vector<1x128xf32>,
    return
  }
  func.func @transform_0(%arg0: i32) -> (i32, i32) {
    %c0_i32 = arith.constant 0 : i32
    %c0_i32_0 = arith.constant 0 : i32
    return %c0_i32, %arg0 : i32, i32
  }
  func.func @transform_1(%arg0: i32) -> (i32, i32, i32) {
    %c0_i32 = arith.constant 0 : i32
    %c0_i32_0 = arith.constant 0 : i32
    %c0_i32_1 = arith.constant 0 : i32
    %c0_i32_2 = arith.constant 0 : i32
    return %c0_i32, %c0_i32_0, %c0_i32_1 : i32, i32, i32
  }
  func.func @transform_2(%arg0: i32) -> (i32, i32) {
    %c0_i32 = arith.constant 0 : i32
    %c0_i32_0 = arith.constant 0 : i32
    %c0_i32_1 = arith.constant 0 : i32
    return %c0_i32, %c0_i32_0 : i32, i32
  }
  func.func @transform_3(%arg0: i32) -> (i32, i32) {
    %c0_i32 = arith.constant 0 : i32
    %c0_i32_0 = arith.constant 0 : i32
    return %c0_i32, %arg0 : i32, i32
  }
}

</mosaic_0001>

<llo_original>
// kernel: tpu_custom_call.1
$region0: #{tpu_custom_call.1}
  #allocation0 [shape = 'u32[]', space=smem, size = 0x4, offset = 0x4, fixed_abs, tag = 'smem constant byte address 0x4 - core index']
  #allocation1 [shape = 'u32[144,128]{1,0:T(1,128)}', space=vmem, size = 0x12000, scoped, tag = 'internal scratch']
  %s0 = inlined_call_operand.vmem [shape: bf16[32,128], index: 0, kind: input, shape index: {}]
  %s1 = inlined_call_operand.hbm [shape: bf16[4,64,64], index: 1, kind: input, shape index: {}]
  %s2 = inlined_call_operand.vmem [shape: f32[64,8], index: 2, kind: input, shape index: {}]
  %s3 = inlined_call_operand.hbm [shape: f32[1,128], index: 3, kind: output, shape index: {}]
  %s4 = sld [smem:[#allocation0]]
  $region26: #{tpu_custom_call.1} parent=0
    _
  %s6 = ssub.s32 1, %s4
  %s7 = scalar_select 0, %s6, %s4
  $region1: #{tpu_custom_call.1} parent=0
    #allocation2 [shape = 'u8[65536]{0}', space=vmem, size = 0x10000, scoped, tag = 'input window, operand 1, single buffered']
    #allocation3 [shape = 's32[1]{0}', space=sflag, size = 0x4, scoped, tag = 'scoped memory for tpu_custom_call.1']
    #allocation4 [shape = 's32[1]{0}', space=sflag, size = 0x4, scoped, tag = 'scoped memory for tpu_custom_call.1']
    #allocation5 [shape = 'u8[512]{0}', space=vmem, size = 0x400, scoped, tag = 'output window, operand 0, single buffered']
    %8 = vsyncpa [#allocation3], 0
    %9 = vsyncpa [#allocation4], 0
    // Predicated region
    $region2: #{tpu_custom_call.1} parent=1 // pred_check
      _
    $region3: #{tpu_custom_call.1} parent=1 // pred_check_branch
      %11 = sbr.rel (0) target = $region5
    $region4: #{tpu_custom_call.1} parent=1 // pred_region
      _
    $region5: #{tpu_custom_call.1} parent=1 // pred_fallthru
      _
    // Predicated region
    $region6: #{tpu_custom_call.1} parent=1 // pred_check
      _
    $region7: #{tpu_custom_call.1} parent=1 // pred_check_branch
      %13 = sbr.rel (0) target = $region9
    $region8: #{tpu_custom_call.1} parent=1 // pred_region
      %s15 = ssub.s32 2048, 2048
      %16 = vsyncadd [#allocation3], %s15
      %s17 = sshll.u32 [#allocation2], 4
      %s18 = int_to_ptr.vmem [resolvable:$true] %s17
      %23 = dma.hbm_to_vmem [thread:$0]  %s1, 2048, %s18, [#allocation3], 64, 64, 4
    $region9: #{tpu_custom_call.1} parent=1 // pred_fallthru
      _
    // Predicated region
    $region10: #{tpu_custom_call.1} parent=1 // pred_check
      _
    $region11: #{tpu_custom_call.1} parent=1 // pred_check_branch
      %25 = sbr.rel (0) target = $region13
    $region12: #{tpu_custom_call.1} parent=1 // pred_region
      _
    $region13: #{tpu_custom_call.1} parent=1 // pred_fallthru
      _
    // Predicated region
    $region14: #{tpu_custom_call.1} parent=1 // pred_check
      _
    $region15: #{tpu_custom_call.1} parent=1 // pred_check_branch
      %27 = sbr.rel (0) target = $region17
    $region16: #{tpu_custom_call.1} parent=1 // pred_region
      %28 = dma.done [#allocation3], 2048
    $region17: #{tpu_custom_call.1} parent=1 // pred_fallthru
      _
    %v30 = vld [vmem:[%s0] sm:$0xf]
    %v31 = vld [vmem:[%s0 + $0x4] sm:$0xf]
    %v32 = vld [vmem:[%s0 + $0x8] sm:$0xf]
    %v33 = vld [vmem:[%s0 + $0xc] sm:$0xf]
    %v34 = vld [vmem:[#allocation2] sm:$0xf]
    %v35 = vld [vmem:[#allocation2 + $0x4] sm:$0xf]
    %v36 = vld [vmem:[#allocation2 + $0x8] sm:$0xf]
    %v37 = vld [vmem:[#allocation2 + $0xc] sm:$0xf]
    %v38 = vld [vmem:[#allocation2 + $0x10] sm:$0xf]
    %v39 = vld [vmem:[#allocation2 + $0x14] sm:$0xf]
    %v40 = vld [vmem:[#allocation2 + $0x18] sm:$0xf]
    %v41 = vld [vmem:[#allocation2 + $0x1c] sm:$0xf]
    %v42 = vld [vmem:[%s2] sm:$0xff]
    %v43 = vld [vmem:[%s2 + $0x8] sm:$0xff]
    %v44 = vld [vmem:[%s2 + $0x10] sm:$0xff]
    %v45 = vld [vmem:[%s2 + $0x18] sm:$0xff]
    %v46 = vld [vmem:[%s2 + $0x20] sm:$0xff]
    %v47 = vld [vmem:[%s2 + $0x28] sm:$0xff]
    %v48 = vld [vmem:[%s2 + $0x30] sm:$0xff]
    %v49 = vld [vmem:[%s2 + $0x38] sm:$0xff]
    %51 = vset.pattern.permute.xlu0 0
    %52 = vperm.xlu0 %51, %v42
    %v53 = vpop.permute.xlu0 %52
    %56 = vset.pattern.permute.xlu0 0
    %57 = vperm.xlu0 %56, %v43
    %v58 = vpop.permute.xlu0 %57
    %61 = vset.pattern.permute.xlu0 0
    %62 = vperm.xlu0 %61, %v44
    %v63 = vpop.permute.xlu0 %62
    %66 = vset.pattern.permute.xlu0 0
    %67 = vperm.xlu0 %66, %v45
    %v68 = vpop.permute.xlu0 %67
    %71 = vset.pattern.permute.xlu0 0
    %72 = vperm.xlu0 %71, %v46
    %v73 = vpop.permute.xlu0 %72
    %76 = vset.pattern.permute.xlu0 0
    %77 = vperm.xlu0 %76, %v47
    %v78 = vpop.permute.xlu0 %77
    %81 = vset.pattern.permute.xlu0 0
    %82 = vperm.xlu0 %81, %v48
    %v83 = vpop.permute.xlu0 %82
    %86 = vset.pattern.permute.xlu0 0
    %87 = vperm.xlu0 %86, %v49
    %v88 = vpop.permute.xlu0 %87
    %v98 = vunpack.c.l.b16 %v34
    %v99 = vunpack.c.l.b16 %v35
    %v100 = vunpack.c.l.b16 %v36
    %v101 = vunpack.c.l.b16 %v37
    %v102 = vunpack.c.l.b16 %v38
    %v103 = vunpack.c.l.b16 %v39
    %v104 = vunpack.c.l.b16 %v40
    %v105 = vunpack.c.l.b16 %v41
    %v106 = vpack.c.b16 %v99, %v98
    %v107 = vpack.c.b16 %v101, %v100
    %v108 = vpack.c.b16 %v103, %v102
    %v109 = vpack.c.b16 %v105, %v104
    %v114 = vunpack.c.l.b16 %v30
    %v115 = vunpack.c.l.b16 %v31
    %v116 = vunpack.c.l.b16 %v32
    %v117 = vunpack.c.l.b16 %v33
    %v118 = vpack.c.b16 %v115, %v114
    %v119 = vpack.c.b16 %v117, %v116
    %vm122 = vcmask 261120
    %v124 = vsel %vm122, %v106, 0
    %v127 = vsel %vm122, %v107, 0
    %v130 = vsel %vm122, %v108, 0
    %v133 = vsel %vm122, %v109, 0
    %135 = vmatprep.subr.bf16.mxu0 0
    %136 = vmatpush1.bf16.msra.mxu0 %v118
    %137 = vmatprep.subr.bf16.mxu0 0
    %138 = vmatpush1.bf16.msra.mxu0 %v119
    %139 = vmatprep.subr.bf16.mxu0 0
    %140 = vmatpush1.bf16.msra.mxu0 0
    %141 = vmatprep.subr.bf16.mxu0 0
    %142 = vmatpush1.bf16.msra.mxu0 0
    %143 = vmatprep.subr.bf16.mxu0 0
    %144 = vmatpush1.bf16.msra.mxu0 0
    %145 = vmatprep.subr.bf16.mxu0 0
    %146 = vmatpush1.bf16.msra.mxu0 0
    %147 = vmatprep.subr.bf16.mxu0 0
    %148 = vmatpush1.bf16.msra.mxu0 0
    %149 = vmatprep.subr.bf16.mxu0 0
    %150 = vmatpush1.bf16.msra.mxu0 0
    %151 = vmatprep.subr.bf16.mxu0 0
    %152 = vmatpush1.bf16.msra.mxu0 0
    %153 = vmatprep.subr.bf16.mxu0 0
    %154 = vmatpush1.bf16.msra.mxu0 0
    %155 = vmatprep.subr.bf16.mxu0 0
    %156 = vmatpush1.bf16.msra.mxu0 0
    %157 = vmatprep.subr.bf16.mxu0 0
    %158 = vmatpush1.bf16.msra.mxu0 0
    %159 = vmatprep.subr.bf16.mxu0 0
    %160 = vmatpush1.bf16.msra.mxu0 0
    %161 = vmatprep.subr.bf16.mxu0 0
    %162 = vmatpush1.bf16.msra.mxu0 0
    %163 = vmatprep.subr.bf16.mxu0 0
    %164 = vmatpush1.bf16.msra.mxu0 0
    %165 = vmatprep.subr.bf16.mxu0 0
    %166 = vmatpush1.bf16.msra.mxu0 0
    %167 = vmatprep.mubr.bf16.mxu0 0
    %168 = vmatmul.mubr.bf16.gmra.mrb[0].mxu0 %v124
    %v169 = vpop.f32.mrb[0].mxu0
    %v170 = vadd.f32 %v53, %v169
    %v171 = vpop.f32.mrb[0].mxu0
    %v172 = vpop.f32.mrb[0].mxu0
    %v173 = vadd.f32 %v58, %v172
    %v174 = vpop.f32.mrb[0].mxu0
    %175 = vmatprep.mubr.bf16.mxu0 0
    %176 = vmatmul.mubr.bf16.gmra.mrb[0].mxu0 %v127
    %v177 = vpop.f32.mrb[0].mxu0
    %v178 = vadd.f32 %v63, %v177
    %v179 = vpop.f32.mrb[0].mxu0
    %v180 = vpop.f32.mrb[0].mxu0
    %v181 = vadd.f32 %v68, %v180
    %v182 = vpop.f32.mrb[0].mxu0
    %183 = vmatprep.mubr.bf16.mxu0 0
    %184 = vmatmul.mubr.bf16.gmra.mrb[0].mxu0 %v130
    %v185 = vpop.f32.mrb[0].mxu0
    %v186 = vadd.f32 %v73, %v185
    %v187 = vpop.f32.mrb[0].mxu0
    %v188 = vpop.f32.mrb[0].mxu0
    %v189 = vadd.f32 %v78, %v188
    %v190 = vpop.f32.mrb[0].mxu0
    %191 = vmatprep.mubr.bf16.mxu0 0
    %192 = vmatmul.mubr.bf16.gmra.mrb[0].mxu0 %v133
    %v193 = vpop.f32.mrb[0].mxu0
    %v194 = vadd.f32 %v83, %v193
    %v195 = vpop.f32.mrb[0].mxu0
    %v196 = vpop.f32.mrb[0].mxu0
    %v197 = vadd.f32 %v88, %v196
    %v198 = vpop.f32.mrb[0].mxu0
    %199 = vdwg.mxu0
    %v200 = vmax.f32 %v170, 0.0
    %v201 = vmax.f32 %v173, 0.0
    %v202 = vmax.f32 %v178, 0.0
    %v203 = vmax.f32 %v181, 0.0
    %v204 = vmax.f32 %v186, 0.0
    %v205 = vmax.f32 %v189, 0.0
    %v206 = vmax.f32 %v194, 0.0
    %v207 = vmax.f32 %v197, 0.0
    %v208 = vpack.c.bf16 %v201, %v200
    %v209 = vpack.c.bf16 %v203, %v202
    %v210 = vpack.c.bf16 %v205, %v204
    %v211 = vpack.c.bf16 %v207, %v206
    %s212 = scalar_lea.vmem [#allocation2], 32
    %v213 = vld [vmem:[%s212] sm:$0xf]
    %v214 = vld [vmem:[%s212 + $0x4] sm:$0xf]
    %v215 = vld [vmem:[%s212 + $0x8] sm:$0xf]
    %v216 = vld [vmem:[%s212 + $0xc] sm:$0xf]
    %v217 = vld [vmem:[%s212 + $0x10] sm:$0xf]
    %v218 = vld [vmem:[%s212 + $0x14] sm:$0xf]
    %v219 = vld [vmem:[%s212 + $0x18] sm:$0xf]
    %v220 = vld [vmem:[%s212 + $0x1c] sm:$0xf]
    %221 = vset.pattern.permute.xlu0 1
    %222 = vperm.xlu0 %221, %v42
    %v223 = vpop.permute.xlu0 %222
    %225 = vset.pattern.permute.xlu0 1
    %226 = vperm.xlu0 %225, %v43
    %v227 = vpop.permute.xlu0 %226
    %229 = vset.pattern.permute.xlu0 1
    %230 = vperm.xlu0 %229, %v44
    %v231 = vpop.permute.xlu0 %230
    %233 = vset.pattern.permute.xlu0 1
    %234 = vperm.xlu0 %233, %v45
    %v235 = vpop.permute.xlu0 %234
    %237 = vset.pattern.permute.xlu0 1
    %238 = vperm.xlu0 %237, %v46
    %v239 = vpop.permute.xlu0 %238
    %241 = vset.pattern.permute.xlu0 1
    %242 = vperm.xlu0 %241, %v47
    %v243 = vpop.permute.xlu0 %242
    %245 = vset.pattern.permute.xlu0 1
    %246 = vperm.xlu0 %245, %v48
    %v247 = vpop.permute.xlu0 %246
    %249 = vset.pattern.permute.xlu0 1
    %250 = vperm.xlu0 %249, %v49
    %v251 = vpop.permute.xlu0 %250
    %v261 = vunpack.c.l.b16 %v213
    %v262 = vunpack.c.l.b16 %v214
    %v263 = vunpack.c.l.b16 %v215
    %v264 = vunpack.c.l.b16 %v216
    %v265 = vunpack.c.l.b16 %v217
    %v266 = vunpack.c.l.b16 %v218
    %v267 = vunpack.c.l.b16 %v219
    %v268 = vunpack.c.l.b16 %v220
    %v269 = vpack.c.b16 %v262, %v261
    %v270 = vpack.c.b16 %v264, %v263
    %v271 = vpack.c.b16 %v266, %v265
    %v272 = vpack.c.b16 %v268, %v267
    %vm273 = vcmask 523264
    %v275 = vsel %vm273, %v269, 0
    %v278 = vsel %vm273, %v270, 0
    %v281 = vsel %vm273, %v271, 0
    %v284 = vsel %vm273, %v272, 0
    %286 = vmatprep.subr.bf16.mxu0 0
    %287 = vmatpush1.bf16.msra.mxu0 %v208
    %288 = vmatprep.subr.bf16.mxu0 0
    %289 = vmatpush1.bf16.msra.mxu0 %v209
    %290 = vmatprep.subr.bf16.mxu0 0
    %291 = vmatpush1.bf16.msra.mxu0 %v210
    %292 = vmatprep.subr.bf16.mxu0 0
    %293 = vmatpush1.bf16.msra.mxu0 %v211
    %294 = vmatprep.subr.bf16.mxu0 0
    %295 = vmatpush1.bf16.msra.mxu0 0
    %296 = vmatprep.subr.bf16.mxu0 0
    %297 = vmatpush1.bf16.msra.mxu0 0
    %298 = vmatprep.subr.bf16.mxu0 0
    %299 = vmatpush1.bf16.msra.mxu0 0
    %300 = vmatprep.subr.bf16.mxu0 0
    %301 = vmatpush1.bf16.msra.mxu0 0
    %302 = vmatprep.subr.bf16.mxu0 0
    %303 = vmatpush1.bf16.msra.mxu0 0
    %304 = vmatprep.subr.bf16.mxu0 0
    %305 = vmatpush1.bf16.msra.mxu0 0
    %306 = vmatprep.subr.bf16.mxu0 0
    %307 = vmatpush1.bf16.msra.mxu0 0
    %308 = vmatprep.subr.bf16.mxu0 0
    %309 = vmatpush1.bf16.msra.mxu0 0
    %310 = vmatprep.subr.bf16.mxu0 0
    %311 = vmatpush1.bf16.msra.mxu0 0
    %312 = vmatprep.subr.bf16.mxu0 0
    %313 = vmatpush1.bf16.msra.mxu0 0
    %314 = vmatprep.subr.bf16.mxu0 0
    %315 = vmatpush1.bf16.msra.mxu0 0
    %316 = vmatprep.subr.bf16.mxu0 0
    %317 = vmatpush1.bf16.msra.mxu0 0
    %318 = vmatprep.mubr.bf16.mxu0 0
    %319 = vmatmul.mubr.bf16.gmra.mrb[0].mxu0 %v275
    %v320 = vpop.f32.mrb[0].mxu0
    %v321 = vadd.f32 %v223, %v320
    %v322 = vpop.f32.mrb[0].mxu0
    %v323 = vpop.f32.mrb[0].mxu0
    %v324 = vadd.f32 %v227, %v323
    %v325 = vpop.f32.mrb[0].mxu0
    %326 = vmatprep.mubr.bf16.mxu0 0
    %327 = vmatmul.mubr.bf16.gmra.mrb[0].mxu0 %v278
    %v328 = vpop.f32.mrb[0].mxu0
    %v329 = vadd.f32 %v231, %v328
    %v330 = vpop.f32.mrb[0].mxu0
    %v331 = vpop.f32.mrb[0].mxu0
    %v332 = vadd.f32 %v235, %v331
    %v333 = vpop.f32.mrb[0].mxu0
    %334 = vmatprep.mubr.bf16.mxu0 0
    %335 = vmatmul.mubr.bf16.gmra.mrb[0].mxu0 %v281
    %v336 = vpop.f32.mrb[0].mxu0
    %v337 = vadd.f32 %v239, %v336
    %v338 = vpop.f32.mrb[0].mxu0
    %v339 = vpop.f32.mrb[0].mxu0
    %v340 = vadd.f32 %v243, %v339
    %v341 = vpop.f32.mrb[0].mxu0
    %342 = vmatprep.mubr.bf16.mxu0 0
    %343 = vmatmul.mubr.bf16.gmra.mrb[0].mxu0 %v284
    %v344 = vpop.f32.mrb[0].mxu0
    %v345 = vadd.f32 %v247, %v344
    %v346 = vpop.f32.mrb[0].mxu0
    %v347 = vpop.f32.mrb[0].mxu0
    %v348 = vadd.f32 %v251, %v347
    %v349 = vpop.f32.mrb[0].mxu0
    %350 = vdwg.mxu0
    %v351 = vmax.f32 %v321, 0.0
    %v352 = vmax.f32 %v324, 0.0
    %v353 = vmax.f32 %v329, 0.0
    %v354 = vmax.f32 %v332, 0.0
    %v355 = vmax.f32 %v337, 0.0
    %v356 = vmax.f32 %v340, 0.0
    %v357 = vmax.f32 %v345, 0.0
    %v358 = vmax.f32 %v348, 0.0
    %v359 = vpack.c.bf16 %v352, %v351
    %v360 = vpack.c.bf16 %v354, %v353
    %v361 = vpack.c.bf16 %v356, %v355
    %v362 = vpack.c.bf16 %v358, %v357
    %s363 = scalar_lea.vmem [#allocation2], 64
    %v364 = vld [vmem:[%s363] sm:$0xf]
    %v365 = vld [vmem:[%s363 + $0x4] sm:$0xf]
    %v366 = vld [vmem:[%s363 + $0x8] sm:$0xf]
    %v367 = vld [vmem:[%s363 + $0xc] sm:$0xf]
    %v368 = vld [vmem:[%s363 + $0x10] sm:$0xf]
    %v369 = vld [vmem:[%s363 + $0x14] sm:$0xf]
    %v370 = vld [vmem:[%s363 + $0x18] sm:$0xf]
    %v371 = vld [vmem:[%s363 + $0x1c] sm:$0xf]
    %372 = vset.pattern.permute.xlu0 2
    %373 = vperm.xlu0 %372, %v42
    %v374 = vpop.permute.xlu0 %373
    %376 = vset.pattern.permute.xlu0 2
    %377 = vperm.xlu0 %376, %v43
    %v378 = vpop.permute.xlu0 %377
    %380 = vset.pattern.permute.xlu0 2
    %381 = vperm.xlu0 %380, %v44
    %v382 = vpop.permute.xlu0 %381
    %384 = vset.pattern.permute.xlu0 2
    %385 = vperm.xlu0 %384, %v45
    %v386 = vpop.permute.xlu0 %385
    %388 = vset.pattern.permute.xlu0 2
    %389 = vperm.xlu0 %388, %v46
    %v390 = vpop.permute.xlu0 %389
    %392 = vset.pattern.permute.xlu0 2
    %393 = vperm.xlu0 %392, %v47
    %v394 = vpop.permute.xlu0 %393
    %396 = vset.pattern.permute.xlu0 2
    %397 = vperm.xlu0 %396, %v48
    %v398 = vpop.permute.xlu0 %397
    %400 = vset.pattern.permute.xlu0 2
    %401 = vperm.xlu0 %400, %v49
    %v402 = vpop.permute.xlu0 %401
    %v412 = vunpack.c.l.b16 %v364
    %v413 = vunpack.c.l.b16 %v365
    %v414 = vunpack.c.l.b16 %v366
    %v415 = vunpack.c.l.b16 %v367
    %v416 = vunpack.c.l.b16 %v368
    %v417 = vunpack.c.l.b16 %v369
    %v418 = vunpack.c.l.b16 %v370
    %v419 = vunpack.c.l.b16 %v371
    %v420 = vpack.c.b16 %v413, %v412
    %v421 = vpack.c.b16 %v415, %v414
    %v422 = vpack.c.b16 %v417, %v416
    %v423 = vpack.c.b16 %v419, %v418
    %v425 = vsel %vm273, %v420, 0
    %v428 = vsel %vm273, %v421, 0
    %v431 = vsel %vm273, %v422, 0
    %v434 = vsel %vm273, %v423, 0
    %436 = vmatprep.subr.bf16.mxu0 0
    %437 = vmatpush1.bf16.msra.mxu0 %v359
    %438 = vmatprep.subr.bf16.mxu0 0
    %439 = vmatpush1.bf16.msra.mxu0 %v360
    %440 = vmatprep.subr.bf16.mxu0 0
    %441 = vmatpush1.bf16.msra.mxu0 %v361
    %442 = vmatprep.subr.bf16.mxu0 0
    %443 = vmatpush1.bf16.msra.mxu0 %v362
    %444 = vmatprep.subr.bf16.mxu0 0
    %445 = vmatpush1.bf16.msra.mxu0 0
    %446 = vmatprep.subr.bf16.mxu0 0
    %447 = vmatpush1.bf16.msra.mxu0 0
    %448 = vmatprep.subr.bf16.mxu0 0
    %449 = vmatpush1.bf16.msra.mxu0 0
    %450 = vmatprep.subr.bf16.mxu0 0
    %451 = vmatpush1.bf16.msra.mxu0 0
    %452 = vmatprep.subr.bf16.mxu0 0
    %453 = vmatpush1.bf16.msra.mxu0 0
    %454 = vmatprep.subr.bf16.mxu0 0
    %455 = vmatpush1.bf16.msra.mxu0 0
    %456 = vmatprep.subr.bf16.mxu0 0
    %457 = vmatpush1.bf16.msra.mxu0 0
    %458 = vmatprep.subr.bf16.mxu0 0
    %459 = vmatpush1.bf16.msra.mxu0 0
    %460 = vmatprep.subr.bf16.mxu0 0
    %461 = vmatpush1.bf16.msra.mxu0 0
    %462 = vmatprep.subr.bf16.mxu0 0
    %463 = vmatpush1.bf16.msra.mxu0 0
    %464 = vmatprep.subr.bf16.mxu0 0
    %465 = vmatpush1.bf16.msra.mxu0 0
    %466 = vmatprep.subr.bf16.mxu0 0
    %467 = vmatpush1.bf16.msra.mxu0 0
    %468 = vmatprep.mubr.bf16.mxu0 0
    %469 = vmatmul.mubr.bf16.gmra.mrb[0].mxu0 %v425
    %v470 = vpop.f32.mrb[0].mxu0
    %v471 = vadd.f32 %v374, %v470
    %v472 = vpop.f32.mrb[0].mxu0
    %v473 = vpop.f32.mrb[0].mxu0
    %v474 = vadd.f32 %v378, %v473
    %v475 = vpop.f32.mrb[0].mxu0
    %476 = vmatprep.mubr.bf16.mxu0 0
    %477 = vmatmul.mubr.bf16.gmra.mrb[0].mxu0 %v428
    %v478 = vpop.f32.mrb[0].mxu0
    %v479 = vadd.f32 %v382, %v478
    %v480 = vpop.f32.mrb[0].mxu0
    %v481 = vpop.f32.mrb[0].mxu0
    %v482 = vadd.f32 %v386, %v481
    %v483 = vpop.f32.mrb[0].mxu0
    %484 = vmatprep.mubr.bf16.mxu0 0
    %485 = vmatmul.mubr.bf16.gmra.mrb[0].mxu0 %v431
    %v486 = vpop.f32.mrb[0].mxu0
    %v487 = vadd.f32 %v390, %v486
    %v488 = vpop.f32.mrb[0].mxu0
    %v489 = vpop.f32.mrb[0].mxu0
    %v490 = vadd.f32 %v394, %v489
    %v491 = vpop.f32.mrb[0].mxu0
    %492 = vmatprep.mubr.bf16.mxu0 0
    %493 = vmatmul.mubr.bf16.gmra.mrb[0].mxu0 %v434
    %v494 = vpop.f32.mrb[0].mxu0
    %v495 = vadd.f32 %v398, %v494
    %v496 = vpop.f32.mrb[0].mxu0
    %v497 = vpop.f32.mrb[0].mxu0
    %v498 = vadd.f32 %v402, %v497
    %v499 = vpop.f32.mrb[0].mxu0
    %500 = vdwg.mxu0
    %v501 = vmax.f32 %v471, 0.0
    %v502 = vmax.f32 %v474, 0.0
    %v503 = vmax.f32 %v479, 0.0
    %v504 = vmax.f32 %v482, 0.0
    %v505 = vmax.f32 %v487, 0.0
    %v506 = vmax.f32 %v490, 0.0
    %v507 = vmax.f32 %v495, 0.0
    %v508 = vmax.f32 %v498, 0.0
    %v509 = vpack.c.bf16 %v502, %v501
    %v510 = vpack.c.bf16 %v504, %v503
    %v511 = vpack.c.bf16 %v506, %v505
    %v512 = vpack.c.bf16 %v508, %v507
    %s513 = scalar_lea.vmem [#allocation2], 96
    %v514 = vld [vmem:[%s513] sm:$0xf]
    %v515 = vld [vmem:[%s513 + $0x4] sm:$0xf]
    %v516 = vld [vmem:[%s513 + $0x8] sm:$0xf]
    %v517 = vld [vmem:[%s513 + $0xc] sm:$0xf]
    %v518 = vld [vmem:[%s513 + $0x10] sm:$0xf]
    %v519 = vld [vmem:[%s513 + $0x14] sm:$0xf]
    %v520 = vld [vmem:[%s513 + $0x18] sm:$0xf]
    %v521 = vld [vmem:[%s513 + $0x1c] sm:$0xf]
    %522 = vset.pattern.permute.xlu0 3
    %523 = vperm.xlu0 %522, %v42
    %v524 = vpop.permute.xlu0 %523
    %526 = vset.pattern.permute.xlu0 3
    %527 = vperm.xlu0 %526, %v43
    %v528 = vpop.permute.xlu0 %527
    %530 = vset.pattern.permute.xlu0 3
    %531 = vperm.xlu0 %530, %v44
    %v532 = vpop.permute.xlu0 %531
    %534 = vset.pattern.permute.xlu0 3
    %535 = vperm.xlu0 %534, %v45
    %v536 = vpop.permute.xlu0 %535
    %538 = vset.pattern.permute.xlu0 3
    %539 = vperm.xlu0 %538, %v46
    %v540 = vpop.permute.xlu0 %539
    %542 = vset.pattern.permute.xlu0 3
    %543 = vperm.xlu0 %542, %v47
    %v544 = vpop.permute.xlu0 %543
    %546 = vset.pattern.permute.xlu0 3
    %547 = vperm.xlu0 %546, %v48
    %v548 = vpop.permute.xlu0 %547
    %550 = vset.pattern.permute.xlu0 3
    %551 = vperm.xlu0 %550, %v49
    %v552 = vpop.permute.xlu0 %551
    %v562 = vunpack.c.l.b16 %v514
    %v563 = vunpack.c.l.b16 %v515
    %v564 = vunpack.c.l.b16 %v516
    %v565 = vunpack.c.l.b16 %v517
    %v566 = vunpack.c.l.b16 %v518
    %v567 = vunpack.c.l.b16 %v519
    %v568 = vunpack.c.l.b16 %v520
    %v569 = vunpack.c.l.b16 %v521
    %v570 = vpack.c.b16 %v563, %v562
    %v571 = vpack.c.b16 %v565, %v564
    %v572 = vpack.c.b16 %v567, %v566
    %v573 = vpack.c.b16 %v569, %v568
    %v575 = vsel %vm273, %v570, 0
    %v578 = vsel %vm273, %v571, 0
    %v581 = vsel %vm273, %v572, 0
    %v584 = vsel %vm273, %v573, 0
    %586 = vmatprep.subr.bf16.mxu0 0
    %587 = vmatpush1.bf16.msra.mxu0 %v509
    %588 = vmatprep.subr.bf16.mxu0 0
    %589 = vmatpush1.bf16.msra.mxu0 %v510
    %590 = vmatprep.subr.bf16.mxu0 0
    %591 = vmatpush1.bf16.msra.mxu0 %v511
    %592 = vmatprep.subr.bf16.mxu0 0
    %593 = vmatpush1.bf16.msra.mxu0 %v512
    %594 = vmatprep.subr.bf16.mxu0 0
    %595 = vmatpush1.bf16.msra.mxu0 0
    %596 = vmatprep.subr.bf16.mxu0 0
    %597 = vmatpush1.bf16.msra.mxu0 0
    %598 = vmatprep.subr.bf16.mxu0 0
    %599 = vmatpush1.bf16.msra.mxu0 0
    %600 = vmatprep.subr.bf16.mxu0 0
    %601 = vmatpush1.bf16.msra.mxu0 0
    %602 = vmatprep.subr.bf16.mxu0 0
    %603 = vmatpush1.bf16.msra.mxu0 0
    %604 = vmatprep.subr.bf16.mxu0 0
    %605 = vmatpush1.bf16.msra.mxu0 0
    %606 = vmatprep.subr.bf16.mxu0 0
    %607 = vmatpush1.bf16.msra.mxu0 0
    %608 = vmatprep.subr.bf16.mxu0 0
    %609 = vmatpush1.bf16.msra.mxu0 0
    %610 = vmatprep.subr.bf16.mxu0 0
    %611 = vmatpush1.bf16.msra.mxu0 0
    %612 = vmatprep.subr.bf16.mxu0 0
    %613 = vmatpush1.bf16.msra.mxu0 0
    %614 = vmatprep.subr.bf16.mxu0 0
    %615 = vmatpush1.bf16.msra.mxu0 0
    %616 = vmatprep.subr.bf16.mxu0 0
    %617 = vmatpush1.bf16.msra.mxu0 0
    %618 = vmatprep.mubr.bf16.mxu0 0
    %619 = vmatmul.mubr.bf16.gmra.mrb[0].mxu0 %v575
    %v620 = vpop.f32.mrb[0].mxu0
    %v621 = vadd.f32 %v524, %v620
    %v622 = vpop.f32.mrb[0].mxu0
    %v623 = vpop.f32.mrb[0].mxu0
    %v624 = vadd.f32 %v528, %v623
    %v625 = vpop.f32.mrb[0].mxu0
    %626 = vmatprep.mubr.bf16.mxu0 0
    %627 = vmatmul.mubr.bf16.gmra.mrb[0].mxu0 %v578
    %v628 = vpop.f32.mrb[0].mxu0
    %v629 = vadd.f32 %v532, %v628
    %v630 = vpop.f32.mrb[0].mxu0
    %v631 = vpop.f32.mrb[0].mxu0
    %v632 = vadd.f32 %v536, %v631
    %v633 = vpop.f32.mrb[0].mxu0
    %634 = vmatprep.mubr.bf16.mxu0 0
    %635 = vmatmul.mubr.bf16.gmra.mrb[0].mxu0 %v581
    %v636 = vpop.f32.mrb[0].mxu0
    %v637 = vadd.f32 %v540, %v636
    %v638 = vpop.f32.mrb[0].mxu0
    %v639 = vpop.f32.mrb[0].mxu0
    %v640 = vadd.f32 %v544, %v639
    %v641 = vpop.f32.mrb[0].mxu0
    %642 = vmatprep.mubr.bf16.mxu0 0
    %643 = vmatmul.mubr.bf16.gmra.mrb[0].mxu0 %v584
    %v644 = vpop.f32.mrb[0].mxu0
    %v645 = vadd.f32 %v548, %v644
    %v646 = vpop.f32.mrb[0].mxu0
    %v647 = vpop.f32.mrb[0].mxu0
    %v648 = vadd.f32 %v552, %v647
    %v649 = vpop.f32.mrb[0].mxu0
    %650 = vdwg.mxu0
    %v651 = vmax.f32 %v621, 0.0
    %v652 = vmax.f32 %v624, 0.0
    %v653 = vmax.f32 %v629, 0.0
    %v654 = vmax.f32 %v632, 0.0
    %v655 = vmax.f32 %v637, 0.0
    %v656 = vmax.f32 %v640, 0.0
    %v657 = vmax.f32 %v645, 0.0
    %v658 = vmax.f32 %v648, 0.0
    %659 = vset.pattern.permute.xlu0 4
    %660 = vperm.xlu0 %659, %v42
    %v661 = vpop.permute.xlu0 %660
    %663 = vset.pattern.permute.xlu0 4
    %664 = vperm.xlu0 %663, %v43
    %v665 = vpop.permute.xlu0 %664
    %667 = vset.pattern.permute.xlu0 4
    %668 = vperm.xlu0 %667, %v44
    %v669 = vpop.permute.xlu0 %668
    %671 = vset.pattern.permute.xlu0 4
    %672 = vperm.xlu0 %671, %v45
    %v673 = vpop.permute.xlu0 %672
    %675 = vset.pattern.permute.xlu0 4
    %676 = vperm.xlu0 %675, %v46
    %v677 = vpop.permute.xlu0 %676
    %679 = vset.pattern.permute.xlu0 4
    %680 = vperm.xlu0 %679, %v47
    %v681 = vpop.permute.xlu0 %680
    %683 = vset.pattern.permute.xlu0 4
    %684 = vperm.xlu0 %683, %v48
    %v685 = vpop.permute.xlu0 %684
    %687 = vset.pattern.permute.xlu0 4
    %688 = vperm.xlu0 %687, %v49
    %v689 = vpop.permute.xlu0 %688
    %v691 = vmul.f32 %v661, %v651
    %v692 = vmul.f32 %v665, %v652
    %v693 = vmul.f32 %v669, %v653
    %v694 = vmul.f32 %v673, %v654
    %v695 = vmul.f32 %v677, %v655
    %v696 = vmul.f32 %v681, %v656
    %v697 = vmul.f32 %v685, %v657
    %v698 = vmul.f32 %v689, %v658
    %v699 = vadd.f32 %v691, %v692
    %v700 = vadd.f32 %v699, %v693
    %v701 = vadd.f32 %v700, %v694
    %v702 = vadd.f32 %v701, %v695
    %v703 = vadd.f32 %v702, %v696
    %v704 = vadd.f32 %v703, %v697
    %v705 = vadd.f32 %v704, %v698
    %v706 = vrot.slane %v705, 4
    %v707 = vadd.f32 %v705, %v706
    %v708 = vrot.slane %v707, 2
    %v709 = vadd.f32 %v707, %v708
    %v710 = vrot.slane %v709, 1
    %v711 = vadd.f32 %v709, %v710
    %v712 = vld [vmem:[%s2] sm:$0x1]
    %714 = vset.pattern.permute.xlu0 5
    %715 = vperm.xlu0 %714, %v712
    %v716 = vpop.permute.xlu0 %715
    %v718 = vadd.f32 %v711, %v716
    %v719 = vmax.f32 %v718, -30.0
    %v720 = vmin.f32 %v719, 30.0
    %v721 = vsub.f32 0.0, %v720
    %v722 = vmul.f32 %v721, 1.442695
    %v723 = vpow.pop %v722
    %v724 = vadd.f32 %v723, 1.0
    %v725 = vrcp.pop %v724
    %726 = vst [vmem:[#allocation5] sm:$0x1] %v725
    // Predicated region
    $region18: #{tpu_custom_call.1} parent=1 // pred_check
      _
    $region19: #{tpu_custom_call.1} parent=1 // pred_check_branch
      %728 = sbr.rel (0) target = $region21
    $region20: #{tpu_custom_call.1} parent=1 // pred_region
      %s730 = ssub.s32 16, 16
      %731 = vsyncadd [#allocation4], %s730
      %s733 = sshll.u32 [#allocation5], 4
      %s734 = int_to_ptr.vmem [resolvable:$true] %s733
      %736 = dma.vmem_to_hbm [thread:$0]  %s734, 16, %s3, [#allocation4]
    $region21: #{tpu_custom_call.1} parent=1 // pred_fallthru
      _
    // Predicated region
    $region22: #{tpu_custom_call.1} parent=1 // pred_check
      _
    $region23: #{tpu_custom_call.1} parent=1 // pred_check_branch
      %738 = sbr.rel (0) target = $region25
    $region24: #{tpu_custom_call.1} parent=1 // pred_region
      %739 = dma.done [#allocation4], 16
    $region25: #{tpu_custom_call.1} parent=1 // pred_fallthru
      _
    %740 = vsyncpa [#allocation3], 1
    %741 = vsyncpa [#allocation4], 1

</llo_original>
